<compile_context>
chip_gen: v5e
topology: v5e:2x2
jax: 0.10.0
libtpu: 0.0.40
codegen_flags: <defaults>
</compile_context>

<pallas_src>
import math
import functools

import jax
import jax.numpy as jnp
from jax import lax
from jax.experimental import pallas as pl
from jax.experimental.pallas import tpu as pltpu


# ---------------------------------------------------------------------------
# Per-batch precompute kernel (grid = (B,)): fc2 / fc3 of x_pt plus the fc1
# fold operands K and r1.  Padded M columns (Mp > M) are masked via r1=-1e30.
# ---------------------------------------------------------------------------
def _pts_precompute_kernel(xpt_ref, w1t_ref, b1_ref, w2_ref, b2_ref,
                           w3_ref, b3_ref, k_ref, c_ref, r1_ref,
                           *, dim_in, m_valid):
    inv_sqrt_c = 1.0 / math.sqrt(float(dim_in))
    xp = xpt_ref[0]                                            # (C, Mp) bf16

    # b_cm = fc2(x_pt^T), channels-major (C, Mp), f32 accumulation.
    bcm = lax.dot_general(w2_ref[...], xp, (((1,), (0,)), ((), ())),
                          preferred_element_type=jnp.float32) + b2_ref[...]
    bcm_bf = bcm.astype(jnp.bfloat16)

    # c = fc3(b), channels-major (C, Mp).
    ccm = lax.dot_general(w3_ref[...], bcm_bf, (((1,), (0,)), ((), ())),
                          preferred_element_type=jnp.float32) + b3_ref[...]
    c_ref[0] = ccm.astype(jnp.bfloat16)

    # K = (W1^T @ b_cm) / sqrt(C): folds fc1 out of the per-N-tile hot loop.
    kmat = lax.dot_general(w1t_ref[...], bcm_bf, (((1,), (0,)), ((), ())),
                           preferred_element_type=jnp.float32)
    k_ref[0] = (kmat * inv_sqrt_c).astype(jnp.bfloat16)

    # r1 = (b1 @ b_cm) / sqrt(C), kept exact in f32; padded columns -> -1e30
    # so they get exactly zero softmax probability in the main kernel.
    r1 = jnp.sum(b1_ref[...] * bcm, axis=0, keepdims=True) * inv_sqrt_c
    mp = r1.shape[-1]
    if m_valid < mp:
        col = lax.broadcasted_iota(jnp.int32, (1, mp), 1)
        r1 = jnp.where(col < m_valid, r1, -1e30)
    r1_ref[0] = r1


# ---------------------------------------------------------------------------
# Main kernel (grid = (B, N // tn)): one score matmul + softmax + one
# attention matmul per N tile.  No cross-tile state -> both axes "parallel".
# ---------------------------------------------------------------------------
def _pts_attention_kernel(x_ref, k_ref, c_ref, r1_ref, o_ref):
    xc = x_ref[0]                                              # (C, tn) f32

    # score^T tile (tn, Mp); fc1 already folded into K / r1 (pre-scaled).
    s = lax.dot_general(xc.astype(jnp.bfloat16), k_ref[0],
                        (((0,), (0,)), ((), ())),
                        preferred_element_type=jnp.float32) + r1_ref[0]

    # softmax over M (f32); divide routed to the EUP via approx reciprocal.
    s = s - jnp.max(s, axis=-1, keepdims=True)
    p = jnp.exp(s)
    p = p * pl.reciprocal(jnp.sum(p, axis=-1, keepdims=True), approx=True)

    # out slab (C, tn) = (atten @ c)^T = c_cm @ p^T, plus residual.
    amap_t = lax.dot_general(c_ref[0], p.astype(jnp.bfloat16),
                             (((1,), (1,)), ((), ())),
                             preferred_element_type=jnp.float32)
    o_ref[0] = (xc + amap_t).astype(o_ref.dtype)


# ---------------------------------------------------------------------------
# Generation-aware tiling / VMEM planning.
# ---------------------------------------------------------------------------
def _vmem_capacity_bytes():
    try:
        info = pltpu.get_tpu_info()
        for attr in ("vmem_capacity_bytes", "vmem_bytes"):
            cap = getattr(info, attr, None)
            if cap:
                return int(cap)
    except Exception:
        pass
    return 64 * 1024 * 1024              # conservative (v7x-class) fallback


def _plan_tiling(N, C, Mp, tn):
    """Pick the N-tile size and the scoped-VMEM limit from the chip's VMEM."""
    cap = _vmem_capacity_bytes()
    small_vmem = cap <= 80 * 1024 * 1024           # v7x: 64 MiB per TensorCore
    budget = (40 if small_vmem else 80) * 1024 * 1024
    limit_cap = (48 if small_vmem else 96) * 1024 * 1024

    def vmem_estimate(t):
        return (2 * C * t * 4 * 2        # x tile, double-buffered f32
                + 2 * C * t * 4          # out tile, double-buffered f32
                + 2 * 2 * C * Mp * 2     # K + c blocks, double-buffered bf16
                + 2 * 2 * Mp * 4         # r1 block, double-buffered f32
                + 3 * t * Mp * 4         # live (t, Mp) f32 softmax temps
                + 2 * 1024 * 1024)       # slack (vregs, compiler scratch)

    if tn is None:
        for cand in (2048, 1024, 512, 256, 128):
            if N % cand == 0 and vmem_estimate(cand) <= budget:
                tn = cand
                break
        if tn is None:
            # TODO(synk): a ragged N (no 128-multiple divisor) would need a
            # masked last tile; fall back to a single full-N tile instead.
            tn = N

    limit = int(max(32 * 1024 * 1024,
                    min(limit_cap, vmem_estimate(tn) + 8 * 1024 * 1024)))
    return tn, limit


def pts_attention(x, x_pt, params, *, tn=None, out_dtype=jnp.float32):
    """x: (B, C, N) f32, x_pt: (B, C, M) f32, params in PyTorch layout.

    Returns (B, C, N) = Pts_attention.forward(x, x_pt).  `out_dtype=bf16` is
    an optional bandwidth-saving variant (changes the numerical contract).
    """
    B, C, N = x.shape
    Bp, Cp, M = x_pt.shape
    assert (Bp, Cp) == (B, C)
    w1, b1, w2, b2, w3, b3 = params       # W*: (C_out, C_in), b*: (C_out,)

    Mp = ((M + 127) // 128) * 128         # lane-aligned score / atten width
    tn, vmem_limit = _plan_tiling(N, C, Mp, tn)
    assert N % tn == 0, "N must be divisible by tn"
    assert tn % 128 == 0 or tn == N, \
        "tn must be a multiple of 128 (lane-dense output stores)"
    assert C % 8 == 0, "C must be a multiple of 8 (sublane alignment)"

    bf16 = jnp.bfloat16
    xpt_bf = x_pt.astype(bf16)
    if Mp != M:
        xpt_bf = jnp.pad(xpt_bf, ((0, 0), (0, 0), (0, Mp - M)))
    w1t_bf = w1.T.astype(bf16)                       # (C_in, C_out)
    w2_bf = w2.astype(bf16)                          # (C_out, C_in)
    w3_bf = w3.astype(bf16)                          # (C_out, C_in)
    b1_col = b1.reshape(C, 1).astype(jnp.float32)
    b2_col = b2.reshape(C, 1).astype(jnp.float32)
    b3_col = b3.reshape(C, 1).astype(jnp.float32)

    # ---- per-batch precompute: K, c_cm, r1 (tiny vs the main pass) ---------
    pre_kernel = functools.partial(_pts_precompute_kernel, dim_in=C, m_valid=M)
    k_cm, c_cm, r1 = pl.pallas_call(
        pre_kernel,
        out_shape=(jax.ShapeDtypeStruct((B, C, Mp), bf16),
                   jax.ShapeDtypeStruct((B, C, Mp), bf16),
                   jax.ShapeDtypeStruct((B, 1, Mp), jnp.float32)),
        grid_spec=pltpu.PrefetchScalarGridSpec(
            num_scalar_prefetch=0, grid=(B,),
            in_specs=[
                pl.BlockSpec((1, C, Mp), lambda b: (b, 0, 0)),   # x_pt (bf16)
                pl.BlockSpec((C, C), lambda b: (0, 0)),          # W1^T (bf16)
                pl.BlockSpec((C, 1), lambda b: (0, 0)),          # b1 (col)
                pl.BlockSpec((C, C), lambda b: (0, 0)),          # W2 (bf16)
                pl.BlockSpec((C, 1), lambda b: (0, 0)),          # b2 (col)
                pl.BlockSpec((C, C), lambda b: (0, 0)),          # W3 (bf16)
                pl.BlockSpec((C, 1), lambda b: (0, 0)),          # b3 (col)
            ],
            out_specs=[
                pl.BlockSpec((1, C, Mp), lambda b: (b, 0, 0)),   # K
                pl.BlockSpec((1, C, Mp), lambda b: (b, 0, 0)),   # c_cm
                pl.BlockSpec((1, 1, Mp), lambda b: (b, 0, 0)),   # r1
            ]),
        compiler_params=pltpu.CompilerParams(
            dimension_semantics=("parallel",),
            vmem_limit_bytes=vmem_limit),
    )(xpt_bf, w1t_bf, b1_col, w2_bf, b2_col, w3_bf, b3_col)

    # ---- main pass over the flattened spatial dim N -------------------------
    flops = 4 * B * N * C * Mp
    bytes_accessed = (4 * 2 * B * C * N          # x read + out write (f32)
                      + 2 * 2 * B * C * Mp       # K + c_cm (bf16)
                      + 4 * B * Mp)              # r1 (f32)

    return pl.pallas_call(
        _pts_attention_kernel,
        out_shape=jax.ShapeDtypeStruct((B, C, N), out_dtype),
        grid_spec=pltpu.PrefetchScalarGridSpec(
            num_scalar_prefetch=0,
            grid=(B, N // tn),
            in_specs=[
                pl.BlockSpec((1, C, tn), lambda b, n: (b, 0, n)),   # x (f32)
                pl.BlockSpec((1, C, Mp), lambda b, n: (b, 0, 0)),   # K (bf16)
                pl.BlockSpec((1, C, Mp), lambda b, n: (b, 0, 0)),   # c (bf16)
                pl.BlockSpec((1, 1, Mp), lambda b, n: (b, 0, 0)),   # r1 (f32)
            ],
            out_specs=pl.BlockSpec((1, C, tn), lambda b, n: (b, 0, n))),
        compiler_params=pltpu.CompilerParams(
            # No cross-tile scratch caching anymore -> both axes independent;
            # on v7x both TensorCores engage even when B == 1.
            dimension_semantics=("parallel", "parallel"),
            vmem_limit_bytes=vmem_limit),
        cost_estimate=pl.CostEstimate(
            flops=flops,
            transcendentals=B * N * Mp,
            bytes_accessed=bytes_accessed),
    )(x, k_cm, c_cm, r1)


def init_params(key, dim_in):
    """Synthetic init matching nn.Linear(dim_in, dim_in), PyTorch layout.

    Weights: xavier_uniform, shape (C_out, C_in).
    Biases:  uniform(-1/sqrt(fan_in), 1/sqrt(fan_in)), shape (C_out,).
    """
    keys = jax.random.split(key, 6)
    wbound = math.sqrt(6.0 / (dim_in + dim_in))
    bbound = 1.0 / math.sqrt(dim_in)
    params = []
    for i in range(3):
        w = jax.random.uniform(keys[2 * i], (dim_in, dim_in),
                               minval=-wbound, maxval=wbound, dtype=jnp.float32)
        b = jax.random.uniform(keys[2 * i + 1], (dim_in,),
                               minval=-bbound, maxval=bbound, dtype=jnp.float32)
        params += [w, b]
    return tuple(params)


def pts_attention_ref(x, x_pt, params):
    """Pure-JAX f32 reference mirroring the PyTorch forward exactly."""
    w1, b1, w2, b2, w3, b3 = params
    a = jnp.swapaxes(x, 1, 2) @ w1.T + b1          # (B, N, C)
    b = jnp.swapaxes(x_pt, 1, 2) @ w2.T + b2       # (B, M, C)
    c = b @ w3.T + b3                              # (B, M, C)  fc3 of fc2 output
    score = jnp.einsum('bmc,bnc->bmn', b, a) / math.sqrt(b.shape[-1])
    atten = jax.nn.softmax(jnp.swapaxes(score, 1, 2), axis=-1)   # (B, N, M)
    amap = jnp.einsum('bnm,bmc->bnc', atten, c)                  # (B, N, C)
    return x + jnp.swapaxes(amap, 1, 2)


if __name__ == "__main__":
    key = jax.random.PRNGKey(0)
    k_x, k_xpt, k_p = jax.random.split(key, 3)

    # Small, lane-aligned stand-in shapes (real model: C = 256).
    B, C, N, M = 2, 128, 512, 128
    x = jax.random.normal(k_x, (B, C, N), dtype=jnp.float32)
    x_pt = jax.random.normal(k_xpt, (B, C, M), dtype=jnp.float32)
    params = init_params(k_p, C)

    out = pts_attention(x, x_pt, params, tn=128)   # 4 N-tiles per batch element
    out = jax.block_until_ready(out)

    ref = pts_attention_ref(x, x_pt, params)
    assert out.shape == (B, C, N)
    max_err = float(jnp.max(jnp.abs(out - ref)))
    # bf16 matmul operands (f32 accumulation), fc1 fold associativity and the
    # approx softmax reciprocal vs a full-f32 reference.
    assert jnp.allclose(out, ref, atol=6e-2, rtol=6e-2), (
        f"mismatch vs reference, max |err| = {max_err}")

    print("KERNEL_OK")
</pallas_src>

<mosaic_0001>
module attributes {stable_mosaic.version = 11 : i64} {
  func.func @_pts_precompute_kernel(%arg0: i32, %arg1: memref<1x128x128xbf16, #tpu.memory_space<vmem>>, %arg2: memref<128x128xbf16, #tpu.memory_space<vmem>>, %arg3: memref<128x1xf32, #tpu.memory_space<vmem>>, %arg4: memref<128x128xbf16, #tpu.memory_space<vmem>>, %arg5: memref<128x1xf32, #tpu.memory_space<vmem>>, %arg6: memref<128x128xbf16, #tpu.memory_space<vmem>>, %arg7: memref<128x1xf32, #tpu.memory_space<vmem>>, %arg8: memref<1x128x128xbf16, #tpu.memory_space<vmem>>, %arg9: memref<1x128x128xbf16, #tpu.memory_space<vmem>>, %arg10: memref<1x1x128xf32, #tpu.memory_space<vmem>>) attributes {dimension_semantics = [#tpu.dimension_semantics<parallel>], iteration_bounds = array<i64: 2>, scalar_prefetch = 0 : i64, scratch_operands = 0 : i64, tpu.core_type = #tpu.core_type<tc>, window_params = [{transform_indices = @transform_0, window_bounds = array<i64: 1, 128, 128>}, {pipeline_mode = #tpu.pipeline_mode<synchronous>, transform_indices = @transform_1, window_bounds = array<i64: 128, 128>}, {pipeline_mode = #tpu.pipeline_mode<synchronous>, transform_indices = @transform_2, window_bounds = array<i64: 128, 1>}, {pipeline_mode = #tpu.pipeline_mode<synchronous>, transform_indices = @transform_3, window_bounds = array<i64: 128, 128>}, {pipeline_mode = #tpu.pipeline_mode<synchronous>, transform_indices = @transform_4, window_bounds = array<i64: 128, 1>}, {pipeline_mode = #tpu.pipeline_mode<synchronous>, transform_indices = @transform_5, window_bounds = array<i64: 128, 128>}, {pipeline_mode = #tpu.pipeline_mode<synchronous>, transform_indices = @transform_6, window_bounds = array<i64: 128, 1>}, {transform_indices = @transform_7, window_bounds = array<i64: 1, 128, 128>}, {transform_indices = @transform_8, window_bounds = array<i64: 1, 128, 128>}, {transform_indices = @transform_9, window_bounds = array<i64: 1, 1, 128>}]} {
    %c0 = arith.constant 0 : index
    %c0_0 = arith.constant 0 : index
    %c0_1 = arith.constant 0 : index
    %0 = vector.load %arg1[%c0, %c0_0, %c0_1] : memref<1x128x128xbf16, #tpu.memory_space<vmem>>, vector<1x128x128xbf16>
    %1 = vector.shape_cast %0 : vector<1x128x128xbf16> to vector<128x128xbf16>
    %c0_2 = arith.constant 0 : index
    %c0_3 = arith.constant 0 : index
    %2 = vector.load %arg4[%c0_2, %c0_3] : memref<128x128xbf16, #tpu.memory_space<vmem>>, vector<128x128xbf16>
    %cst = arith.constant dense<0.000000e+00> : vector<128x128xf32>
    %3 = tpu.matmul %2, %1, %cst {dimension_numbers = #tpu.dot_dimension_numbers<[1], [0], [0], [1], [0, 0, 1, 1], [], []>} : vector<128x128xbf16>, vector<128x128xbf16>, vector<128x128xf32> -> vector<128x128xf32>
    %c0_4 = arith.constant 0 : index
    %c0_5 = arith.constant 0 : index
    %4 = vector.load %arg5[%c0_4, %c0_5] : memref<128x1xf32, #tpu.memory_space<vmem>>, vector<128x1xf32>
    %5 = vector.broadcast %4 : vector<128x1xf32> to vector<128x128xf32>
    %6 = arith.addf %3, %5 : vector<128x128xf32>
    %7 = arith.truncf %6 : vector<128x128xf32> to vector<128x128xbf16>
    %c0_6 = arith.constant 0 : index
    %c0_7 = arith.constant 0 : index
    %8 = vector.load %arg6[%c0_6, %c0_7] : memref<128x128xbf16, #tpu.memory_space<vmem>>, vector<128x128xbf16>
    %cst_8 = arith.constant dense<0.000000e+00> : vector<128x128xf32>
    %9 = tpu.matmul %8, %7, %cst_8 {dimension_numbers = #tpu.dot_dimension_numbers<[1], [0], [0], [1], [0, 0, 1, 1], [], []>} : vector<128x128xbf16>, vector<128x128xbf16>, vector<128x128xf32> -> vector<128x128xf32>
    %c0_9 = arith.constant 0 : index
    %c0_10 = arith.constant 0 : index
    %10 = vector.load %arg7[%c0_9, %c0_10] : memref<128x1xf32, #tpu.memory_space<vmem>>, vector<128x1xf32>
    %11 = vector.broadcast %10 : vector<128x1xf32> to vector<128x128xf32>
    %12 = arith.addf %9, %11 : vector<128x128xf32>
    %13 = arith.truncf %12 : vector<128x128xf32> to vector<128x128xbf16>
    %c0_11 = arith.constant 0 : index
    %c0_12 = arith.constant 0 : index
    %c0_13 = arith.constant 0 : index
    %14 = vector.load %arg9[%c0_11, %c0_12, %c0_13] : memref<1x128x128xbf16, #tpu.memory_space<vmem>>, vector<1x128x128xbf16>
    %15 = vector.shape_cast %14 : vector<1x128x128xbf16> to vector<128x128xbf16>
    %16 = vector.shape_cast %13 : vector<128x128xbf16> to vector<1x128x128xbf16>
    tpu.vector_store %arg9[%c0_11, %c0_12, %c0_13], %16 {strides = array<i32>} : memref<1x128x128xbf16, #tpu.memory_space<vmem>>, vector<1x128x128xbf16>,
    %c0_14 = arith.constant 0 : index
    %c0_15 = arith.constant 0 : index
    %17 = vector.load %arg2[%c0_14, %c0_15] : memref<128x128xbf16, #tpu.memory_space<vmem>>, vector<128x128xbf16>
    %cst_16 = arith.constant dense<0.000000e+00> : vector<128x128xf32>
    %18 = tpu.matmul %17, %7, %cst_16 {dimension_numbers = #tpu.dot_dimension_numbers<[1], [0], [0], [1], [0, 0, 1, 1], [], []>} : vector<128x128xbf16>, vector<128x128xbf16>, vector<128x128xf32> -> vector<128x128xf32>
    %cst_17 = arith.constant 0.0883883461 : f32
    %19 = vector.broadcast %cst_17 : f32 to vector<128x128xf32>
    %20 = arith.mulf %18, %19 : vector<128x128xf32>
    %21 = arith.truncf %20 : vector<128x128xf32> to vector<128x128xbf16>
    %c0_18 = arith.constant 0 : index
    %c0_19 = arith.constant 0 : index
    %c0_20 = arith.constant 0 : index
    %22 = vector.load %arg8[%c0_18, %c0_19, %c0_20] : memref<1x128x128xbf16, #tpu.memory_space<vmem>>, vector<1x128x128xbf16>
    %23 = vector.shape_cast %22 : vector<1x128x128xbf16> to vector<128x128xbf16>
    %24 = vector.shape_cast %21 : vector<128x128xbf16> to vector<1x128x128xbf16>
    tpu.vector_store %arg8[%c0_18, %c0_19, %c0_20], %24 {strides = array<i32>} : memref<1x128x128xbf16, #tpu.memory_space<vmem>>, vector<1x128x128xbf16>,
    %c0_21 = arith.constant 0 : index
    %c0_22 = arith.constant 0 : index
    %25 = vector.load %arg3[%c0_21, %c0_22] : memref<128x1xf32, #tpu.memory_space<vmem>>, vector<128x1xf32>
    %26 = vector.broadcast %25 : vector<128x1xf32> to vector<128x128xf32>
    %27 = arith.mulf %26, %6 : vector<128x128xf32>
    %cst_23 = arith.constant dense<0.000000e+00> : vector<128xf32>
    %28 = vector.multi_reduction <add>, %27, %cst_23 [0] : vector<128x128xf32> to vector<128xf32>
    %29 = vector.shape_cast %28 : vector<128xf32> to vector<1x128xf32>
    %cst_24 = arith.constant 0.0883883461 : f32
    %30 = vector.broadcast %cst_24 : f32 to vector<1x128xf32>
    %31 = arith.mulf %29, %30 : vector<1x128xf32>
    %c0_25 = arith.constant 0 : index
    %c0_26 = arith.constant 0 : index
    %c0_27 = arith.constant 0 : index
    %32 = vector.load %arg10[%c0_25, %c0_26, %c0_27] : memref<1x1x128xf32, #tpu.memory_space<vmem>>, vector<1x1x128xf32>
    %33 = vector.shape_cast %32 : vector<1x1x128xf32> to vector<1x128xf32>
    %34 = vector.shape_cast %31 : vector<1x128xf32> to vector<1x1x128xf32>
    tpu.vector_store %arg10[%c0_25, %c0_26, %c0_27], %34 {strides = array<i32>} : memref<1x1x128xf32, #tpu.memory_space<vmem>>, vector<1x1x128xf32>,
    return
  }
  func.func @transform_0(%arg0: i32) -> (i32, i32, i32) {
    %c0_i32 = arith.constant 0 : i32
    %c0_i32_0 = arith.constant 0 : i32
    %c0_i32_1 = arith.constant 0 : i32
    return %arg0, %c0_i32, %c0_i32_0 : i32, i32, i32
  }
  func.func @transform_1(%arg0: i32) -> (i32, i32) {
    %c0_i32 = arith.constant 0 : i32
    %c0_i32_0 = arith.constant 0 : i32
    %c0_i32_1 = arith.constant 0 : i32
    return %c0_i32, %c0_i32_0 : i32, i32
  }
  func.func @transform_2(%arg0: i32) -> (i32, i32) {
    %c0_i32 = arith.constant 0 : i32
    %c0_i32_0 = arith.constant 0 : i32
    %c0_i32_1 = arith.constant 0 : i32
    return %c0_i32, %c0_i32_0 : i32, i32
  }
  func.func @transform_3(%arg0: i32) -> (i32, i32) {
    %c0_i32 = arith.constant 0 : i32
    %c0_i32_0 = arith.constant 0 : i32
    %c0_i32_1 = arith.constant 0 : i32
    return %c0_i32, %c0_i32_0 : i32, i32
  }
  func.func @transform_4(%arg0: i32) -> (i32, i32) {
    %c0_i32 = arith.constant 0 : i32
    %c0_i32_0 = arith.constant 0 : i32
    %c0_i32_1 = arith.constant 0 : i32
    return %c0_i32, %c0_i32_0 : i32, i32
  }
  func.func @transform_5(%arg0: i32) -> (i32, i32) {
    %c0_i32 = arith.constant 0 : i32
    %c0_i32_0 = arith.constant 0 : i32
    %c0_i32_1 = arith.constant 0 : i32
    return %c0_i32, %c0_i32_0 : i32, i32
  }
  func.func @transform_6(%arg0: i32) -> (i32, i32) {
    %c0_i32 = arith.constant 0 : i32
    %c0_i32_0 = arith.constant 0 : i32
    %c0_i32_1 = arith.constant 0 : i32
    return %c0_i32, %c0_i32_0 : i32, i32
  }
  func.func @transform_7(%arg0: i32) -> (i32, i32, i32) {
    %c0_i32 = arith.constant 0 : i32
    %c0_i32_0 = arith.constant 0 : i32
    %c0_i32_1 = arith.constant 0 : i32
    return %arg0, %c0_i32, %c0_i32_0 : i32, i32, i32
  }
  func.func @transform_8(%arg0: i32) -> (i32, i32, i32) {
    %c0_i32 = arith.constant 0 : i32
    %c0_i32_0 = arith.constant 0 : i32
    %c0_i32_1 = arith.constant 0 : i32
    return %arg0, %c0_i32, %c0_i32_0 : i32, i32, i32
  }
  func.func @transform_9(%arg0: i32) -> (i32, i32, i32) {
    %c0_i32 = arith.constant 0 : i32
    %c0_i32_0 = arith.constant 0 : i32
    %c0_i32_1 = arith.constant 0 : i32
    return %arg0, %c0_i32, %c0_i32_0 : i32, i32, i32
  }
}

</mosaic_0001>

<llo_original>
// kernel: tpu_custom_call.1
$region0: #{tpu_custom_call.1}
  #allocation0 [shape = 'u32[]', space=smem, size = 0x4, offset = 0x4, fixed_abs, tag = 'smem constant byte address 0x4 - core index']
  #allocation1 [shape = 'u32[72,128]{1,0:T(1,128)}', space=vmem, size = 0x9000, scoped, tag = 'internal scratch']
  %s0 = inlined_call_operand.vmem [shape: bf16[2,128,128], index: 0, kind: input, shape index: {}]
  %s1 = inlined_call_operand.vmem [shape: bf16[128,128], index: 1, kind: input, shape index: {}]
  %s2 = inlined_call_operand.vmem [shape: f32[128,1], index: 2, kind: input, shape index: {}]
  %s3 = inlined_call_operand.vmem [shape: bf16[128,128], index: 3, kind: input, shape index: {}]
  %s4 = inlined_call_operand.vmem [shape: f32[128,1], index: 4, kind: input, shape index: {}]
  %s5 = inlined_call_operand.vmem [shape: bf16[128,128], index: 5, kind: input, shape index: {}]
  %s6 = inlined_call_operand.vmem [shape: f32[128,1], index: 6, kind: input, shape index: {}]
  %s7 = inlined_call_operand.hbm [shape: bf16[2,128,128], index: 7, kind: output, shape index: {0}]
  %s8 = inlined_call_operand.hbm [shape: bf16[2,128,128], index: 8, kind: output, shape index: {1}]
  %s9 = inlined_call_operand.hbm [shape: f32[2,1,128], index: 9, kind: output, shape index: {2}]
  %10 = xla_tuple %s7, %s8, %s9
  %s11 = sld [smem:[#allocation0]]
  $region77: #{tpu_custom_call.1} parent=0
    _
  %s13 = ssub.s32 1, %s11
  %s14 = scalar_select 0, %s13, %s11
  $region1: #{tpu_custom_call.1} parent=0
    #allocation2 [shape = 'u8[65536]{0}', space=vmem, size = 0x10000, scoped, tag = 'output window, operand 0']
    #allocation3 [shape = 's32[2]{0}', space=sflag, size = 0x8, scoped, tag = 'scoped memory for tpu_custom_call.1']
    #allocation4 [shape = 'u8[65536]{0}', space=vmem, size = 0x10000, scoped, tag = 'output window, operand 1']
    #allocation5 [shape = 's32[2]{0}', space=sflag, size = 0x8, scoped, tag = 'scoped memory for tpu_custom_call.1']
    #allocation6 [shape = 'u8[1024]{0}', space=vmem, size = 0x400, scoped, tag = 'output window, operand 2']
    %15 = vsyncpa [#allocation3], 0
    %s16 = scalar_lea.sflag [#allocation3], 1
    %17 = vsyncpa %s16, 0
    %18 = vsyncpa [#allocation5], 0
    %s19 = scalar_lea.sflag [#allocation5], 1
    %20 = vsyncpa %s19, 0
    loop: start=0, step=1, limit=4
    $region2: #{tpu_custom_call.1} parent=1 // loop_pre_header
      _
    $region3: #{tpu_custom_call.1} parent=1 // loop_header
      %s22 = sphi 0, %s26
      %p23 = scmp.ge.s32.totalorder %s22, 4
      %s32 = sphi 0, %s34
      %s35 = sphi 0, %s32
      %s36 = sphi 0, %s35
      %s52 = sphi 0, %s36
      %s56 = sphi 0, %s56
      %s58 = sphi 0, %s56
      %s59 = sphi 0, %s58
      %s73 = sphi 0, %s59
      %s77 = sphi 0, %s77
      %s79 = sphi 0, %s77
      %s80 = sphi 0, %s79
      %s94 = sphi 0, %s80
      %s98 = sphi 0, %s98
      %s100 = sphi 0, %s98
      %s101 = sphi 0, %s100
      %s115 = sphi 0, %s101
      %s119 = sphi 0, %s119
      %s121 = sphi 0, %s119
      %s122 = sphi 0, %s121
      %s136 = sphi 0, %s122
      %s140 = sphi 0, %s140
      %s142 = sphi 0, %s140
      %s143 = sphi 0, %s142
      %s157 = sphi 0, %s143
      %s161 = sphi 0, %s161
      %s163 = sphi 0, %s161
      %s164 = sphi 0, %s163
      %s178 = sphi 0, %s164
      %s184 = sphi 0, %s186
      %s187 = sphi 0, %s184
      %s188 = sphi 0, %s187
      %s204 = sphi 0, %s188
      %s210 = sphi 0, %s212
      %s213 = sphi 0, %s210
      %s214 = sphi 0, %s213
      %s230 = sphi 0, %s214
      %s236 = sphi 0, %s238
      %s239 = sphi 0, %s236
      %s240 = sphi 0, %s239
      %s256 = sphi 0, %s240
    $region4: #{tpu_custom_call.1} parent=1 // loop_header_branch
      %25 = sbr.rel (%p23) target = $region8
    $region5: #{tpu_custom_call.1} parent=1 // loop_body
      %s27 = ssub.s32 %s22, 1
      %s28 = ssub.s32 %s22, 2
      %s29 = sadd.s32 %s22, 1
      %s30 = ssub.s32 %s22, %s29
      %p31 = scmp.eq.s32.totalorder %s30, 0
      %s33 = sadd.s32 %s32, 1
      %s34 = scalar_select %p31, %s32, %s33
      %p37 = pneg %p31
      %p38 = scmp.eq.s32.totalorder %s22, 1
      %p39 = por %p37, %p38
      %p40 = scmp.ne.s32.totalorder %s32, %s35
      %p41 = scmp.eq.s32.totalorder %s22, 0
      %p42 = por %p40, %p41
      %p43 = scmp.ne.s32.totalorder %s32, %s35
      %p44 = scmp.eq.s32.totalorder %s27, 1
      %p45 = por %p43, %p44
      %p46 = scmp.ne.s32.totalorder %s35, %s36
      %p47 = scmp.eq.s32.totalorder %s27, 0
      %p48 = por %p46, %p47
      %p49 = scmp.ne.s32.totalorder %s35, %s36
      %p50 = scmp.eq.s32.totalorder %s28, 1
      %p51 = por %p49, %p50
      %p53 = scmp.ne.s32.totalorder %s36, %s52
      %p54 = scmp.eq.s32.totalorder %s28, 0
      %p55 = por %p53, %p54
      %s57 = sadd.s32 %s56, 1
      %p60 = scmp.eq.s32.totalorder %s22, 1
      %p61 = scmp.ne.s32.totalorder %s56, %s58
      %p62 = scmp.eq.s32.totalorder %s22, 0
      %p63 = por %p61, %p62
      %p64 = scmp.ne.s32.totalorder %s56, %s58
      %p65 = scmp.eq.s32.totalorder %s27, 1
      %p66 = por %p64, %p65
      %p67 = scmp.ne.s32.totalorder %s58, %s59
      %p68 = scmp.eq.s32.totalorder %s27, 0
      %p69 = por %p67, %p68
      %p70 = scmp.ne.s32.totalorder %s58, %s59
      %p71 = scmp.eq.s32.totalorder %s28, 1
      %p72 = por %p70, %p71
      %p74 = scmp.ne.s32.totalorder %s59, %s73
      %p75 = scmp.eq.s32.totalorder %s28, 0
      %p76 = por %p74, %p75
      %s78 = sadd.s32 %s77, 1
      %p81 = scmp.eq.s32.totalorder %s22, 1
      %p82 = scmp.ne.s32.totalorder %s77, %s79
      %p83 = scmp.eq.s32.totalorder %s22, 0
      %p84 = por %p82, %p83
      %p85 = scmp.ne.s32.totalorder %s77, %s79
      %p86 = scmp.eq.s32.totalorder %s27, 1
      %p87 = por %p85, %p86
      %p88 = scmp.ne.s32.totalorder %s79, %s80
      %p89 = scmp.eq.s32.totalorder %s27, 0
      %p90 = por %p88, %p89
      %p91 = scmp.ne.s32.totalorder %s79, %s80
      %p92 = scmp.eq.s32.totalorder %s28, 1
      %p93 = por %p91, %p92
      %p95 = scmp.ne.s32.totalorder %s80, %s94
      %p96 = scmp.eq.s32.totalorder %s28, 0
      %p97 = por %p95, %p96
      %s99 = sadd.s32 %s98, 1
      %p102 = scmp.eq.s32.totalorder %s22, 1
      %p103 = scmp.ne.s32.totalorder %s98, %s100
      %p104 = scmp.eq.s32.totalorder %s22, 0
      %p105 = por %p103, %p104
      %p106 = scmp.ne.s32.totalorder %s98, %s100
      %p107 = scmp.eq.s32.totalorder %s27, 1
      %p108 = por %p106, %p107
      %p109 = scmp.ne.s32.totalorder %s100, %s101
      %p110 = scmp.eq.s32.totalorder %s27, 0
      %p111 = por %p109, %p110
      %p112 = scmp.ne.s32.totalorder %s100, %s101
      %p113 = scmp.eq.s32.totalorder %s28, 1
      %p114 = por %p112, %p113
      %p116 = scmp.ne.s32.totalorder %s101, %s115
      %p117 = scmp.eq.s32.totalorder %s28, 0
      %p118 = por %p116, %p117
      %s120 = sadd.s32 %s119, 1
      %p123 = scmp.eq.s32.totalorder %s22, 1
      %p124 = scmp.ne.s32.totalorder %s119, %s121
      %p125 = scmp.eq.s32.totalorder %s22, 0
      %p126 = por %p124, %p125
      %p127 = scmp.ne.s32.totalorder %s119, %s121
      %p128 = scmp.eq.s32.totalorder %s27, 1
      %p129 = por %p127, %p128
      %p130 = scmp.ne.s32.totalorder %s121, %s122
      %p131 = scmp.eq.s32.totalorder %s27, 0
      %p132 = por %p130, %p131
      %p133 = scmp.ne.s32.totalorder %s121, %s122
      %p134 = scmp.eq.s32.totalorder %s28, 1
      %p135 = por %p133, %p134
      %p137 = scmp.ne.s32.totalorder %s122, %s136
      %p138 = scmp.eq.s32.totalorder %s28, 0
      %p139 = por %p137, %p138
      %s141 = sadd.s32 %s140, 1
      %p144 = scmp.eq.s32.totalorder %s22, 1
      %p145 = scmp.ne.s32.totalorder %s140, %s142
      %p146 = scmp.eq.s32.totalorder %s22, 0
      %p147 = por %p145, %p146
      %p148 = scmp.ne.s32.totalorder %s140, %s142
      %p149 = scmp.eq.s32.totalorder %s27, 1
      %p150 = por %p148, %p149
      %p151 = scmp.ne.s32.totalorder %s142, %s143
      %p152 = scmp.eq.s32.totalorder %s27, 0
      %p153 = por %p151, %p152
      %p154 = scmp.ne.s32.totalorder %s142, %s143
      %p155 = scmp.eq.s32.totalorder %s28, 1
      %p156 = por %p154, %p155
      %p158 = scmp.ne.s32.totalorder %s143, %s157
      %p159 = scmp.eq.s32.totalorder %s28, 0
      %p160 = por %p158, %p159
      %s162 = sadd.s32 %s161, 1
      %p165 = scmp.eq.s32.totalorder %s22, 1
      %p166 = scmp.ne.s32.totalorder %s161, %s163
      %p167 = scmp.eq.s32.totalorder %s22, 0
      %p168 = por %p166, %p167
      %p169 = scmp.ne.s32.totalorder %s161, %s163
      %p170 = scmp.eq.s32.totalorder %s27, 1
      %p171 = por %p169, %p170
      %p172 = scmp.ne.s32.totalorder %s163, %s164
      %p173 = scmp.eq.s32.totalorder %s27, 0
      %p174 = por %p172, %p173
      %p175 = scmp.ne.s32.totalorder %s163, %s164
      %p176 = scmp.eq.s32.totalorder %s28, 1
      %p177 = por %p175, %p176
      %p179 = scmp.ne.s32.totalorder %s164, %s178
      %p180 = scmp.eq.s32.totalorder %s28, 0
      %p181 = por %p179, %p180
      %s182 = ssub.s32 %s22, %s29
      %p183 = scmp.eq.s32.totalorder %s182, 0
      %s185 = sadd.s32 %s184, 1
      %s186 = scalar_select %p183, %s184, %s185
      %p189 = pneg %p183
      %p190 = scmp.eq.s32.totalorder %s22, 1
      %p191 = por %p189, %p190
      %p192 = scmp.ne.s32.totalorder %s184, %s187
      %p193 = scmp.eq.s32.totalorder %s22, 0
      %p194 = por %p192, %p193
      %p195 = scmp.ne.s32.totalorder %s184, %s187
      %p196 = scmp.eq.s32.totalorder %s27, 1
      %p197 = por %p195, %p196
      %p198 = scmp.ne.s32.totalorder %s187, %s188
      %p199 = scmp.eq.s32.totalorder %s27, 0
      %p200 = por %p198, %p199
      %p201 = scmp.ne.s32.totalorder %s187, %s188
      %p202 = scmp.eq.s32.totalorder %s28, 1
      %p203 = por %p201, %p202
      %p205 = scmp.ne.s32.totalorder %s188, %s204
      %p206 = scmp.eq.s32.totalorder %s28, 0
      %p207 = por %p205, %p206
      %s208 = ssub.s32 %s22, %s29
      %p209 = scmp.eq.s32.totalorder %s208, 0
      %s211 = sadd.s32 %s210, 1
      %s212 = scalar_select %p209, %s210, %s211
      %p215 = pneg %p209
      %p216 = scmp.eq.s32.totalorder %s22, 1
      %p217 = por %p215, %p216
      %p218 = scmp.ne.s32.totalorder %s210, %s213
      %p219 = scmp.eq.s32.totalorder %s22, 0
      %p220 = por %p218, %p219
      %p221 = scmp.ne.s32.totalorder %s210, %s213
      %p222 = scmp.eq.s32.totalorder %s27, 1
      %p223 = por %p221, %p222
      %p224 = scmp.ne.s32.totalorder %s213, %s214
      %p225 = scmp.eq.s32.totalorder %s27, 0
      %p226 = por %p224, %p225
      %p227 = scmp.ne.s32.totalorder %s213, %s214
      %p228 = scmp.eq.s32.totalorder %s28, 1
      %p229 = por %p227, %p228
      %p231 = scmp.ne.s32.totalorder %s214, %s230
      %p232 = scmp.eq.s32.totalorder %s28, 0
      %p233 = por %p231, %p232
      %s234 = ssub.s32 %s22, %s29
      %p235 = scmp.eq.s32.totalorder %s234, 0
      %s237 = sadd.s32 %s236, 1
      %s238 = scalar_select %p235, %s236, %s237
      %p241 = pneg %p235
      %p242 = scmp.eq.s32.totalorder %s22, 1
      %p243 = por %p241, %p242
      %p244 = scmp.ne.s32.totalorder %s236, %s239
      %p245 = scmp.eq.s32.totalorder %s22, 0
      %p246 = por %p244, %p245
      %p247 = scmp.ne.s32.totalorder %s236, %s239
      %p248 = scmp.eq.s32.totalorder %s27, 1
      %p249 = por %p247, %p248
      %p250 = scmp.ne.s32.totalorder %s239, %s240
      %p251 = scmp.eq.s32.totalorder %s27, 0
      %p252 = por %p250, %p251
      %p253 = scmp.ne.s32.totalorder %s239, %s240
      %p254 = scmp.eq.s32.totalorder %s28, 1
      %p255 = por %p253, %p254
      %p257 = scmp.ne.s32.totalorder %s240, %s256
      %p258 = scmp.eq.s32.totalorder %s28, 0
      %p259 = por %p257, %p258
      %p260 = scmp.le.s32.totalorder 1, %s22
      %p261 = scmp.lt.s32.totalorder %s22, 3
      %p262 = pnand %p260, %p261
      %p263 = pneg %p262
      // Predicated region
      $region9: #{tpu_custom_call.1} parent=5 // pred_check
        _
      $region10: #{tpu_custom_call.1} parent=5 // pred_check_branch
        %265 = sbr.rel (%p262) target = $region12
      $region11: #{tpu_custom_call.1} parent=5 // pred_region
        %s266 = ssub.s32 %s22, 1
        // Predicated region
        $region13: #{tpu_custom_call.1} parent=11 // pred_check
          %p267 = pneg %p69
        $region14: #{tpu_custom_call.1} parent=11 // pred_check_branch
          %269 = sbr.rel (%p267) target = $region16
        $region15: #{tpu_custom_call.1} parent=11 // pred_region
          _
        $region16: #{tpu_custom_call.1} parent=11 // pred_fallthru
          _
        // Predicated region
        $region17: #{tpu_custom_call.1} parent=11 // pred_check
          %p270 = pneg %p90
        $region18: #{tpu_custom_call.1} parent=11 // pred_check_branch
          %272 = sbr.rel (%p270) target = $region20
        $region19: #{tpu_custom_call.1} parent=11 // pred_region
          _
        $region20: #{tpu_custom_call.1} parent=11 // pred_fallthru
          _
        // Predicated region
        $region21: #{tpu_custom_call.1} parent=11 // pred_check
          %p273 = pneg %p111
        $region22: #{tpu_custom_call.1} parent=11 // pred_check_branch
          %275 = sbr.rel (%p273) target = $region24
        $region23: #{tpu_custom_call.1} parent=11 // pred_region
          _
        $region24: #{tpu_custom_call.1} parent=11 // pred_fallthru
          _
        // Predicated region
        $region25: #{tpu_custom_call.1} parent=11 // pred_check
          %p276 = pneg %p132
        $region26: #{tpu_custom_call.1} parent=11 // pred_check_branch
          %278 = sbr.rel (%p276) target = $region28
        $region27: #{tpu_custom_call.1} parent=11 // pred_region
          _
        $region28: #{tpu_custom_call.1} parent=11 // pred_fallthru
          _
        // Predicated region
        $region29: #{tpu_custom_call.1} parent=11 // pred_check
          %p279 = pneg %p153
        $region30: #{tpu_custom_call.1} parent=11 // pred_check_branch
          %281 = sbr.rel (%p279) target = $region32
        $region31: #{tpu_custom_call.1} parent=11 // pred_region
          _
        $region32: #{tpu_custom_call.1} parent=11 // pred_fallthru
          _
        // Predicated region
        $region33: #{tpu_custom_call.1} parent=11 // pred_check
          %p282 = pneg %p174
        $region34: #{tpu_custom_call.1} parent=11 // pred_check_branch
          %284 = sbr.rel (%p282) target = $region36
        $region35: #{tpu_custom_call.1} parent=11 // pred_region
          _
        $region36: #{tpu_custom_call.1} parent=11 // pred_fallthru
          _
      $region12: #{tpu_custom_call.1} parent=5 // pred_fallthru
        _
      %p285 = scmp.lt.s32.totalorder %s22, 2
      // Predicated region
      $region37: #{tpu_custom_call.1} parent=5 // pred_check
        %p286 = pneg %p285
      $region38: #{tpu_custom_call.1} parent=5 // pred_check_branch
        %288 = sbr.rel (%p286) target = $region40
      $region39: #{tpu_custom_call.1} parent=5 // pred_region
        // Predicated region
        $region41: #{tpu_custom_call.1} parent=39 // pred_check
          %p289 = pneg %p42
        $region42: #{tpu_custom_call.1} parent=39 // pred_check_branch
          %291 = sbr.rel (%p289) target = $region44
        $region43: #{tpu_custom_call.1} parent=39 // pred_region
          %p292 = scmp.lt.s32.totalorder %s22, 1
          %s293 = scalar_select %p292, %s22, 1
          %s294 = smul.addr %s293, 16
          %s295 = smul.addr %s294, 4
          %s296 = scalar_lea.vmem %s0, %s295
        $region44: #{tpu_custom_call.1} parent=39 // pred_fallthru
          _
      $region40: #{tpu_custom_call.1} parent=5 // pred_fallthru
        _
      %p297 = scmp.le.s32.totalorder 1, %s22
      %p298 = scmp.lt.s32.totalorder %s22, 3
      %p299 = pnand %p297, %p298
      %p300 = pneg %p299
      // Predicated region
      $region45: #{tpu_custom_call.1} parent=5 // pred_check
        _
      $region46: #{tpu_custom_call.1} parent=5 // pred_check_branch
        %302 = sbr.rel (%p299) target = $region48
      $region47: #{tpu_custom_call.1} parent=5 // pred_region
        %s303 = ssub.s32 %s22, 1
        %p304 = scmp.lt.s32.totalorder %s27, 1
        %s305 = scalar_select %p304, %s27, 1
        %s306 = smul.addr %s305, 16
        %s307 = smul.addr %s306, 4
        %s308 = scalar_lea.vmem %s0, %s307
        %p309 = pneg %p48
        %p310 = pneg %p45
        %p311 = pneg %p69
        %p312 = pneg %p66
        %p313 = pneg %p90
        %p314 = pneg %p87
        %p315 = pneg %p111
        %p316 = pneg %p108
        %p317 = pneg %p132
        %p318 = pneg %p129
        %p319 = pneg %p153
        %p320 = pneg %p150
        %p321 = pneg %p174
        %p322 = pneg %p171
        %p323 = pneg %p200
        %p324 = pneg %p197
        %s325 = sand.u32 %s187, 1
        %s326 = scalar_lea.sflag [#allocation3], %s325
        %s327 = sand.u32 %s187, 1
        %s328 = smul.addr %s327, 64
        %s329 = scalar_lea.vmem [#allocation2], %s328
        %p330 = pneg %p226
        %p331 = pneg %p223
        %s332 = sand.u32 %s27, 1
        %s333 = scalar_lea.sflag [#allocation5], %s332
        %s334 = sand.u32 %s213, 1
        %s335 = smul.addr %s334, 64
        %s336 = scalar_lea.vmem [#allocation4], %s335
        %p337 = pneg %p252
        %p338 = pneg %p249
        %s339 = sand.u32 %s27, 1
        %s340 = scalar_lea.sflag [#allocation5], %s339
        %s341 = sand.u32 %s239, 1
        %s342 = scalar_lea.vmem [#allocation6], %s341
        %p343 = scmp.lt.s32.totalorder %s27, 1
        %s344 = scalar_select %p343, %s27, 1
        %s345 = smul.addr %s344, 16
        %s346 = smul.addr %s345, 4
        %s347 = scalar_lea.vmem %s0, %s346
        %v348 = vld [vmem:[%s347] sm:$0xf]
        %v349 = vld [vmem:[%s347 + $0x4] sm:$0xf]
        %v350 = vld [vmem:[%s347 + $0x8] sm:$0xf]
        %v351 = vld [vmem:[%s347 + $0xc] sm:$0xf]
        %v352 = vld [vmem:[%s347 + $0x10] sm:$0xf]
        %v353 = vld [vmem:[%s347 + $0x14] sm:$0xf]
        %v354 = vld [vmem:[%s347 + $0x18] sm:$0xf]
        %v355 = vld [vmem:[%s347 + $0x1c] sm:$0xf]
        %v356 = vld [vmem:[%s347 + $0x20] sm:$0xf]
        %v357 = vld [vmem:[%s347 + $0x24] sm:$0xf]
        %v358 = vld [vmem:[%s347 + $0x28] sm:$0xf]
        %v359 = vld [vmem:[%s347 + $0x2c] sm:$0xf]
        %v360 = vld [vmem:[%s347 + $0x30] sm:$0xf]
        %v361 = vld [vmem:[%s347 + $0x34] sm:$0xf]
        %v362 = vld [vmem:[%s347 + $0x38] sm:$0xf]
        %v363 = vld [vmem:[%s347 + $0x3c] sm:$0xf]
        %v364 = vld [vmem:[%s3] sm:$0xf]
        %v365 = vld [vmem:[%s3 + $0x4] sm:$0xf]
        %v366 = vld [vmem:[%s3 + $0x8] sm:$0xf]
        %v367 = vld [vmem:[%s3 + $0xc] sm:$0xf]
        %v368 = vld [vmem:[%s3 + $0x10] sm:$0xf]
        %v369 = vld [vmem:[%s3 + $0x14] sm:$0xf]
        %v370 = vld [vmem:[%s3 + $0x18] sm:$0xf]
        %v371 = vld [vmem:[%s3 + $0x1c] sm:$0xf]
        %v372 = vld [vmem:[%s3 + $0x20] sm:$0xf]
        %v373 = vld [vmem:[%s3 + $0x24] sm:$0xf]
        %v374 = vld [vmem:[%s3 + $0x28] sm:$0xf]
        %v375 = vld [vmem:[%s3 + $0x2c] sm:$0xf]
        %v376 = vld [vmem:[%s3 + $0x30] sm:$0xf]
        %v377 = vld [vmem:[%s3 + $0x34] sm:$0xf]
        %v378 = vld [vmem:[%s3 + $0x38] sm:$0xf]
        %v379 = vld [vmem:[%s3 + $0x3c] sm:$0xf]
        %v380 = vld [vmem:[%s4] sm:$0xff]
        %v381 = vld [vmem:[%s4 + $0x8] sm:$0xff]
        %v382 = vld [vmem:[%s4 + $0x10] sm:$0xff]
        %v383 = vld [vmem:[%s4 + $0x18] sm:$0xff]
        %v384 = vld [vmem:[%s4 + $0x20] sm:$0xff]
        %v385 = vld [vmem:[%s4 + $0x28] sm:$0xff]
        %v386 = vld [vmem:[%s4 + $0x30] sm:$0xff]
        %v387 = vld [vmem:[%s4 + $0x38] sm:$0xff]
        %v388 = vld [vmem:[%s4 + $0x40] sm:$0xff]
        %v389 = vld [vmem:[%s4 + $0x48] sm:$0xff]
        %v390 = vld [vmem:[%s4 + $0x50] sm:$0xff]
        %v391 = vld [vmem:[%s4 + $0x58] sm:$0xff]
        %v392 = vld [vmem:[%s4 + $0x60] sm:$0xff]
        %v393 = vld [vmem:[%s4 + $0x68] sm:$0xff]
        %v394 = vld [vmem:[%s4 + $0x70] sm:$0xff]
        %v395 = vld [vmem:[%s4 + $0x78] sm:$0xff]
        %397 = vset.pattern.permute.xlu0 0
        %398 = vperm.xlu0 %397, %v380
        %v399 = vpop.permute.xlu0 %398
        %402 = vset.pattern.permute.xlu0 0
        %403 = vperm.xlu0 %402, %v381
        %v404 = vpop.permute.xlu0 %403
        %407 = vset.pattern.permute.xlu0 0
        %408 = vperm.xlu0 %407, %v382
        %v409 = vpop.permute.xlu0 %408
        %412 = vset.pattern.permute.xlu0 0
        %413 = vperm.xlu0 %412, %v383
        %v414 = vpop.permute.xlu0 %413
        %417 = vset.pattern.permute.xlu0 0
        %418 = vperm.xlu0 %417, %v384
        %v419 = vpop.permute.xlu0 %418
        %422 = vset.pattern.permute.xlu0 0
        %423 = vperm.xlu0 %422, %v385
        %v424 = vpop.permute.xlu0 %423
        %427 = vset.pattern.permute.xlu0 0
        %428 = vperm.xlu0 %427, %v386
        %v429 = vpop.permute.xlu0 %428
        %432 = vset.pattern.permute.xlu0 0
        %433 = vperm.xlu0 %432, %v387
        %v434 = vpop.permute.xlu0 %433
        %437 = vset.pattern.permute.xlu0 0
        %438 = vperm.xlu0 %437, %v388
        %v439 = vpop.permute.xlu0 %438
        %442 = vset.pattern.permute.xlu0 0
        %443 = vperm.xlu0 %442, %v389
        %v444 = vpop.permute.xlu0 %443
        %447 = vset.pattern.permute.xlu0 0
        %448 = vperm.xlu0 %447, %v390
        %v449 = vpop.permute.xlu0 %448
        %452 = vset.pattern.permute.xlu0 0
        %453 = vperm.xlu0 %452, %v391
        %v454 = vpop.permute.xlu0 %453
        %457 = vset.pattern.permute.xlu0 0
        %458 = vperm.xlu0 %457, %v392
        %v459 = vpop.permute.xlu0 %458
        %462 = vset.pattern.permute.xlu0 0
        %463 = vperm.xlu0 %462, %v393
        %v464 = vpop.permute.xlu0 %463
        %467 = vset.pattern.permute.xlu0 0
        %468 = vperm.xlu0 %467, %v394
        %v469 = vpop.permute.xlu0 %468
        %472 = vset.pattern.permute.xlu0 0
        %473 = vperm.xlu0 %472, %v395
        %v474 = vpop.permute.xlu0 %473
        %v492 = vunpack.c.l.b16 %v364
        %v493 = vunpack.c.l.b16 %v365
        %v494 = vunpack.c.l.b16 %v366
        %v495 = vunpack.c.l.b16 %v367
        %v496 = vunpack.c.l.b16 %v368
        %v497 = vunpack.c.l.b16 %v369
        %v498 = vunpack.c.l.b16 %v370
        %v499 = vunpack.c.l.b16 %v371
        %v500 = vunpack.c.l.b16 %v372
        %v501 = vunpack.c.l.b16 %v373
        %v502 = vunpack.c.l.b16 %v374
        %v503 = vunpack.c.l.b16 %v375
        %v504 = vunpack.c.l.b16 %v376
        %v505 = vunpack.c.l.b16 %v377
        %v506 = vunpack.c.l.b16 %v378
        %v507 = vunpack.c.l.b16 %v379
        %v508 = vpack.c.b16 %v493, %v492
        %v509 = vpack.c.b16 %v495, %v494
        %v510 = vpack.c.b16 %v497, %v496
        %v511 = vpack.c.b16 %v499, %v498
        %v512 = vpack.c.b16 %v501, %v500
        %v513 = vpack.c.b16 %v503, %v502
        %v514 = vpack.c.b16 %v505, %v504
        %v515 = vpack.c.b16 %v507, %v506
        %v540 = vunpack.c.l.b16 %v348
        %v541 = vunpack.c.l.b16 %v349
        %v542 = vunpack.c.l.b16 %v350
        %v543 = vunpack.c.l.b16 %v351
        %v544 = vunpack.c.l.b16 %v352
        %v545 = vunpack.c.l.b16 %v353
        %v546 = vunpack.c.l.b16 %v354
        %v547 = vunpack.c.l.b16 %v355
        %v548 = vunpack.c.l.b16 %v356
        %v549 = vunpack.c.l.b16 %v357
        %v550 = vunpack.c.l.b16 %v358
        %v551 = vunpack.c.l.b16 %v359
        %v552 = vunpack.c.l.b16 %v360
        %v553 = vunpack.c.l.b16 %v361
        %v554 = vunpack.c.l.b16 %v362
        %v555 = vunpack.c.l.b16 %v363
        %v556 = vpack.c.b16 %v541, %v540
        %v557 = vpack.c.b16 %v543, %v542
        %v558 = vpack.c.b16 %v545, %v544
        %v559 = vpack.c.b16 %v547, %v546
        %v560 = vpack.c.b16 %v549, %v548
        %v561 = vpack.c.b16 %v551, %v550
        %v562 = vpack.c.b16 %v553, %v552
        %v563 = vpack.c.b16 %v555, %v554
        %572 = vmatpush.bf16.msra.mxu0 %v563
        %573 = vmatpush.bf16.msra.mxu0 %v562
        %574 = vmatpush.bf16.msra.mxu0 %v561
        %575 = vmatpush.bf16.msra.mxu0 %v560
        %576 = vmatpush.bf16.msra.mxu0 %v559
        %577 = vmatpush.bf16.msra.mxu0 %v558
        %578 = vmatpush.bf16.msra.mxu0 %v557
        %579 = vmatpush.bf16.msra.mxu0 %v556
        %580 = vmatmul.bf16.gmra.mxu0 %v508
        %v581 = vpop.f32.mrf.mxu0
        %v582 = vadd.f32 %v399, %v581
        %v583 = vpop.f32.mrf.mxu0
        %v584 = vadd.f32 %v404, %v583
        %585 = vmatmul.bf16.gmra.mxu0 %v509
        %v586 = vpop.f32.mrf.mxu0
        %v587 = vadd.f32 %v409, %v586
        %v588 = vpop.f32.mrf.mxu0
        %v589 = vadd.f32 %v414, %v588
        %590 = vmatmul.bf16.gmra.mxu0 %v510
        %v591 = vpop.f32.mrf.mxu0
        %v592 = vadd.f32 %v419, %v591
        %v593 = vpop.f32.mrf.mxu0
        %v594 = vadd.f32 %v424, %v593
        %595 = vmatmul.bf16.gmra.mxu0 %v511
        %v596 = vpop.f32.mrf.mxu0
        %v597 = vadd.f32 %v429, %v596
        %v598 = vpop.f32.mrf.mxu0
        %v599 = vadd.f32 %v434, %v598
        %600 = vmatmul.bf16.gmra.mxu0 %v512
        %v601 = vpop.f32.mrf.mxu0
        %v602 = vadd.f32 %v439, %v601
        %v603 = vpop.f32.mrf.mxu0
        %v604 = vadd.f32 %v444, %v603
        %605 = vmatmul.bf16.gmra.mxu0 %v513
        %v606 = vpop.f32.mrf.mxu0
        %v607 = vadd.f32 %v449, %v606
        %v608 = vpop.f32.mrf.mxu0
        %v609 = vadd.f32 %v454, %v608
        %610 = vmatmul.bf16.gmra.mxu0 %v514
        %v611 = vpop.f32.mrf.mxu0
        %v612 = vadd.f32 %v459, %v611
        %v613 = vpop.f32.mrf.mxu0
        %v614 = vadd.f32 %v464, %v613
        %615 = vmatmul.bf16.gmra.mxu0 %v515
        %v616 = vpop.f32.mrf.mxu0
        %v617 = vadd.f32 %v469, %v616
        %v618 = vpop.f32.mrf.mxu0
        %v619 = vadd.f32 %v474, %v618
        %620 = vdwg.mxu0
        %v621 = vpack.c.bf16 %v584, %v582
        %v622 = vpack.c.bf16 %v589, %v587
        %v623 = vpack.c.bf16 %v594, %v592
        %v624 = vpack.c.bf16 %v599, %v597
        %v625 = vpack.c.bf16 %v604, %v602
        %v626 = vpack.c.bf16 %v609, %v607
        %v627 = vpack.c.bf16 %v614, %v612
        %v628 = vpack.c.bf16 %v619, %v617
        %v629 = vld [vmem:[%s5] sm:$0xf]
        %v630 = vld [vmem:[%s5 + $0x4] sm:$0xf]
        %v631 = vld [vmem:[%s5 + $0x8] sm:$0xf]
        %v632 = vld [vmem:[%s5 + $0xc] sm:$0xf]
        %v633 = vld [vmem:[%s5 + $0x10] sm:$0xf]
        %v634 = vld [vmem:[%s5 + $0x14] sm:$0xf]
        %v635 = vld [vmem:[%s5 + $0x18] sm:$0xf]
        %v636 = vld [vmem:[%s5 + $0x1c] sm:$0xf]
        %v637 = vld [vmem:[%s5 + $0x20] sm:$0xf]
        %v638 = vld [vmem:[%s5 + $0x24] sm:$0xf]
        %v639 = vld [vmem:[%s5 + $0x28] sm:$0xf]
        %v640 = vld [vmem:[%s5 + $0x2c] sm:$0xf]
        %v641 = vld [vmem:[%s5 + $0x30] sm:$0xf]
        %v642 = vld [vmem:[%s5 + $0x34] sm:$0xf]
        %v643 = vld [vmem:[%s5 + $0x38] sm:$0xf]
        %v644 = vld [vmem:[%s5 + $0x3c] sm:$0xf]
        %v645 = vld [vmem:[%s6] sm:$0xff]
        %v646 = vld [vmem:[%s6 + $0x8] sm:$0xff]
        %v647 = vld [vmem:[%s6 + $0x10] sm:$0xff]
        %v648 = vld [vmem:[%s6 + $0x18] sm:$0xff]
        %v649 = vld [vmem:[%s6 + $0x20] sm:$0xff]
        %v650 = vld [vmem:[%s6 + $0x28] sm:$0xff]
        %v651 = vld [vmem:[%s6 + $0x30] sm:$0xff]
        %v652 = vld [vmem:[%s6 + $0x38] sm:$0xff]
        %v653 = vld [vmem:[%s6 + $0x40] sm:$0xff]
        %v654 = vld [vmem:[%s6 + $0x48] sm:$0xff]
        %v655 = vld [vmem:[%s6 + $0x50] sm:$0xff]
        %v656 = vld [vmem:[%s6 + $0x58] sm:$0xff]
        %v657 = vld [vmem:[%s6 + $0x60] sm:$0xff]
        %v658 = vld [vmem:[%s6 + $0x68] sm:$0xff]
        %v659 = vld [vmem:[%s6 + $0x70] sm:$0xff]
        %v660 = vld [vmem:[%s6 + $0x78] sm:$0xff]
        %662 = vset.pattern.permute.xlu0 0
        %663 = vperm.xlu0 %662, %v645
        %v664 = vpop.permute.xlu0 %663
        %667 = vset.pattern.permute.xlu0 0
        %668 = vperm.xlu0 %667, %v646
        %v669 = vpop.permute.xlu0 %668
        %672 = vset.pattern.permute.xlu0 0
        %673 = vperm.xlu0 %672, %v647
        %v674 = vpop.permute.xlu0 %673
        %677 = vset.pattern.permute.xlu0 0
        %678 = vperm.xlu0 %677, %v648
        %v679 = vpop.permute.xlu0 %678
        %682 = vset.pattern.permute.xlu0 0
        %683 = vperm.xlu0 %682, %v649
        %v684 = vpop.permute.xlu0 %683
        %687 = vset.pattern.permute.xlu0 0
        %688 = vperm.xlu0 %687, %v650
        %v689 = vpop.permute.xlu0 %688
        %692 = vset.pattern.permute.xlu0 0
        %693 = vperm.xlu0 %692, %v651
        %v694 = vpop.permute.xlu0 %693
        %697 = vset.pattern.permute.xlu0 0
        %698 = vperm.xlu0 %697, %v652
        %v699 = vpop.permute.xlu0 %698
        %702 = vset.pattern.permute.xlu0 0
        %703 = vperm.xlu0 %702, %v653
        %v704 = vpop.permute.xlu0 %703
        %707 = vset.pattern.permute.xlu0 0
        %708 = vperm.xlu0 %707, %v654
        %v709 = vpop.permute.xlu0 %708
        %712 = vset.pattern.permute.xlu0 0
        %713 = vperm.xlu0 %712, %v655
        %v714 = vpop.permute.xlu0 %713
        %717 = vset.pattern.permute.xlu0 0
        %718 = vperm.xlu0 %717, %v656
        %v719 = vpop.permute.xlu0 %718
        %722 = vset.pattern.permute.xlu0 0
        %723 = vperm.xlu0 %722, %v657
        %v724 = vpop.permute.xlu0 %723
        %727 = vset.pattern.permute.xlu0 0
        %728 = vperm.xlu0 %727, %v658
        %v729 = vpop.permute.xlu0 %728
        %732 = vset.pattern.permute.xlu0 0
        %733 = vperm.xlu0 %732, %v659
        %v734 = vpop.permute.xlu0 %733
        %737 = vset.pattern.permute.xlu0 0
        %738 = vperm.xlu0 %737, %v660
        %v739 = vpop.permute.xlu0 %738
        %v757 = vunpack.c.l.b16 %v629
        %v758 = vunpack.c.l.b16 %v630
        %v759 = vunpack.c.l.b16 %v631
        %v760 = vunpack.c.l.b16 %v632
        %v761 = vunpack.c.l.b16 %v633
        %v762 = vunpack.c.l.b16 %v634
        %v763 = vunpack.c.l.b16 %v635
        %v764 = vunpack.c.l.b16 %v636
        %v765 = vunpack.c.l.b16 %v637
        %v766 = vunpack.c.l.b16 %v638
        %v767 = vunpack.c.l.b16 %v639
        %v768 = vunpack.c.l.b16 %v640
        %v769 = vunpack.c.l.b16 %v641
        %v770 = vunpack.c.l.b16 %v642
        %v771 = vunpack.c.l.b16 %v643
        %v772 = vunpack.c.l.b16 %v644
        %v773 = vpack.c.b16 %v758, %v757
        %v774 = vpack.c.b16 %v760, %v759
        %v775 = vpack.c.b16 %v762, %v761
        %v776 = vpack.c.b16 %v764, %v763
        %v777 = vpack.c.b16 %v766, %v765
        %v778 = vpack.c.b16 %v768, %v767
        %v779 = vpack.c.b16 %v770, %v769
        %v780 = vpack.c.b16 %v772, %v771
        %789 = vmatpush.bf16.msra.mxu0 %v628
        %790 = vmatpush.bf16.msra.mxu0 %v627
        %791 = vmatpush.bf16.msra.mxu0 %v626
        %792 = vmatpush.bf16.msra.mxu0 %v625
        %793 = vmatpush.bf16.msra.mxu0 %v624
        %794 = vmatpush.bf16.msra.mxu0 %v623
        %795 = vmatpush.bf16.msra.mxu0 %v622
        %796 = vmatpush.bf16.msra.mxu0 %v621
        %797 = vmatmul.bf16.gmra.mxu0 %v773
        %v798 = vpop.f32.mrf.mxu0
        %v799 = vadd.f32 %v664, %v798
        %v800 = vpop.f32.mrf.mxu0
        %v801 = vadd.f32 %v669, %v800
        %802 = vmatmul.bf16.gmra.mxu0 %v774
        %v803 = vpop.f32.mrf.mxu0
        %v804 = vadd.f32 %v674, %v803
        %v805 = vpop.f32.mrf.mxu0
        %v806 = vadd.f32 %v679, %v805
        %807 = vmatmul.bf16.gmra.mxu0 %v775
        %v808 = vpop.f32.mrf.mxu0
        %v809 = vadd.f32 %v684, %v808
        %v810 = vpop.f32.mrf.mxu0
        %v811 = vadd.f32 %v689, %v810
        %812 = vmatmul.bf16.gmra.mxu0 %v776
        %v813 = vpop.f32.mrf.mxu0
        %v814 = vadd.f32 %v694, %v813
        %v815 = vpop.f32.mrf.mxu0
        %v816 = vadd.f32 %v699, %v815
        %817 = vmatmul.bf16.gmra.mxu0 %v777
        %v818 = vpop.f32.mrf.mxu0
        %v819 = vadd.f32 %v704, %v818
        %v820 = vpop.f32.mrf.mxu0
        %v821 = vadd.f32 %v709, %v820
        %822 = vmatmul.bf16.gmra.mxu0 %v778
        %v823 = vpop.f32.mrf.mxu0
        %v824 = vadd.f32 %v714, %v823
        %v825 = vpop.f32.mrf.mxu0
        %v826 = vadd.f32 %v719, %v825
        %827 = vmatmul.bf16.gmra.mxu0 %v779
        %v828 = vpop.f32.mrf.mxu0
        %v829 = vadd.f32 %v724, %v828
        %v830 = vpop.f32.mrf.mxu0
        %v831 = vadd.f32 %v729, %v830
        %832 = vmatmul.bf16.gmra.mxu0 %v780
        %v833 = vpop.f32.mrf.mxu0
        %v834 = vadd.f32 %v734, %v833
        %v835 = vpop.f32.mrf.mxu0
        %v836 = vadd.f32 %v739, %v835
        %837 = vdwg.mxu0
        %v838 = vpack.c.bf16 %v799, %v799
        %v839 = vpack.c.bf16 %v801, %v801
        %v840 = vpack.c.bf16 %v804, %v804
        %v841 = vpack.c.bf16 %v806, %v806
        %v842 = vpack.c.bf16 %v809, %v809
        %v843 = vpack.c.bf16 %v811, %v811
        %v844 = vpack.c.bf16 %v814, %v814
        %v845 = vpack.c.bf16 %v816, %v816
        %v846 = vpack.c.bf16 %v819, %v819
        %v847 = vpack.c.bf16 %v821, %v821
        %v848 = vpack.c.bf16 %v824, %v824
        %v849 = vpack.c.bf16 %v826, %v826
        %v850 = vpack.c.bf16 %v829, %v829
        %v851 = vpack.c.bf16 %v831, %v831
        %v852 = vpack.c.bf16 %v834, %v834
        %v853 = vpack.c.bf16 %v836, %v836
        %854 = vst [vmem:[%s336] sm:$0xf] %v838
        %855 = vst [vmem:[%s336 + $0x4] sm:$0xf] %v839
        %856 = vst [vmem:[%s336 + $0x8] sm:$0xf] %v840
        %857 = vst [vmem:[%s336 + $0xc] sm:$0xf] %v841
        %858 = vst [vmem:[%s336 + $0x10] sm:$0xf] %v842
        %859 = vst [vmem:[%s336 + $0x14] sm:$0xf] %v843
        %860 = vst [vmem:[%s336 + $0x18] sm:$0xf] %v844
        %861 = vst [vmem:[%s336 + $0x1c] sm:$0xf] %v845
        %862 = vst [vmem:[%s336 + $0x20] sm:$0xf] %v846
        %863 = vst [vmem:[%s336 + $0x24] sm:$0xf] %v847
        %864 = vst [vmem:[%s336 + $0x28] sm:$0xf] %v848
        %865 = vst [vmem:[%s336 + $0x2c] sm:$0xf] %v849
        %866 = vst [vmem:[%s336 + $0x30] sm:$0xf] %v850
        %867 = vst [vmem:[%s336 + $0x34] sm:$0xf] %v851
        %868 = vst [vmem:[%s336 + $0x38] sm:$0xf] %v852
        %869 = vst [vmem:[%s336 + $0x3c] sm:$0xf] %v853
        %v870 = vld [vmem:[%s1] sm:$0xf]
        %v871 = vld [vmem:[%s1 + $0x4] sm:$0xf]
        %v872 = vld [vmem:[%s1 + $0x8] sm:$0xf]
        %v873 = vld [vmem:[%s1 + $0xc] sm:$0xf]
        %v874 = vld [vmem:[%s1 + $0x10] sm:$0xf]
        %v875 = vld [vmem:[%s1 + $0x14] sm:$0xf]
        %v876 = vld [vmem:[%s1 + $0x18] sm:$0xf]
        %v877 = vld [vmem:[%s1 + $0x1c] sm:$0xf]
        %v878 = vld [vmem:[%s1 + $0x20] sm:$0xf]
        %v879 = vld [vmem:[%s1 + $0x24] sm:$0xf]
        %v880 = vld [vmem:[%s1 + $0x28] sm:$0xf]
        %v881 = vld [vmem:[%s1 + $0x2c] sm:$0xf]
        %v882 = vld [vmem:[%s1 + $0x30] sm:$0xf]
        %v883 = vld [vmem:[%s1 + $0x34] sm:$0xf]
        %v884 = vld [vmem:[%s1 + $0x38] sm:$0xf]
        %v885 = vld [vmem:[%s1 + $0x3c] sm:$0xf]
        %v902 = vunpack.c.l.b16 %v870
        %v903 = vunpack.c.l.b16 %v871
        %v904 = vunpack.c.l.b16 %v872
        %v905 = vunpack.c.l.b16 %v873
        %v906 = vunpack.c.l.b16 %v874
        %v907 = vunpack.c.l.b16 %v875
        %v908 = vunpack.c.l.b16 %v876
        %v909 = vunpack.c.l.b16 %v877
        %v910 = vunpack.c.l.b16 %v878
        %v911 = vunpack.c.l.b16 %v879
        %v912 = vunpack.c.l.b16 %v880
        %v913 = vunpack.c.l.b16 %v881
        %v914 = vunpack.c.l.b16 %v882
        %v915 = vunpack.c.l.b16 %v883
        %v916 = vunpack.c.l.b16 %v884
        %v917 = vunpack.c.l.b16 %v885
        %v918 = vpack.c.b16 %v903, %v902
        %v919 = vpack.c.b16 %v905, %v904
        %v920 = vpack.c.b16 %v907, %v906
        %v921 = vpack.c.b16 %v909, %v908
        %v922 = vpack.c.b16 %v911, %v910
        %v923 = vpack.c.b16 %v913, %v912
        %v924 = vpack.c.b16 %v915, %v914
        %v925 = vpack.c.b16 %v917, %v916
        %934 = vmatpush.bf16.msra.mxu0 %v628
        %935 = vmatpush.bf16.msra.mxu0 %v627
        %936 = vmatpush.bf16.msra.mxu0 %v626
        %937 = vmatpush.bf16.msra.mxu0 %v625
        %938 = vmatpush.bf16.msra.mxu0 %v624
        %939 = vmatpush.bf16.msra.mxu0 %v623
        %940 = vmatpush.bf16.msra.mxu0 %v622
        %941 = vmatpush.bf16.msra.mxu0 %v621
        %942 = vmatmul.bf16.gmra.mxu0 %v918
        %v943 = vpop.f32.mrf.mxu0
        %v944 = vadd.f32 0.0, %v943
        %v945 = vpop.f32.mrf.mxu0
        %v946 = vadd.f32 0.0, %v945
        %947 = vmatmul.bf16.gmra.mxu0 %v919
        %v948 = vpop.f32.mrf.mxu0
        %v949 = vadd.f32 0.0, %v948
        %v950 = vpop.f32.mrf.mxu0
        %v951 = vadd.f32 0.0, %v950
        %952 = vmatmul.bf16.gmra.mxu0 %v920
        %v953 = vpop.f32.mrf.mxu0
        %v954 = vadd.f32 0.0, %v953
        %v955 = vpop.f32.mrf.mxu0
        %v956 = vadd.f32 0.0, %v955
        %957 = vmatmul.bf16.gmra.mxu0 %v921
        %v958 = vpop.f32.mrf.mxu0
        %v959 = vadd.f32 0.0, %v958
        %v960 = vpop.f32.mrf.mxu0
        %v961 = vadd.f32 0.0, %v960
        %962 = vmatmul.bf16.gmra.mxu0 %v922
        %v963 = vpop.f32.mrf.mxu0
        %v964 = vadd.f32 0.0, %v963
        %v965 = vpop.f32.mrf.mxu0
        %v966 = vadd.f32 0.0, %v965
        %967 = vmatmul.bf16.gmra.mxu0 %v923
        %v968 = vpop.f32.mrf.mxu0
        %v969 = vadd.f32 0.0, %v968
        %v970 = vpop.f32.mrf.mxu0
        %v971 = vadd.f32 0.0, %v970
        %972 = vmatmul.bf16.gmra.mxu0 %v924
        %v973 = vpop.f32.mrf.mxu0
        %v974 = vadd.f32 0.0, %v973
        %v975 = vpop.f32.mrf.mxu0
        %v976 = vadd.f32 0.0, %v975
        %977 = vmatmul.bf16.gmra.mxu0 %v925
        %v978 = vpop.f32.mrf.mxu0
        %v979 = vadd.f32 0.0, %v978
        %v980 = vpop.f32.mrf.mxu0
        %v981 = vadd.f32 0.0, %v980
        %982 = vdwg.mxu0
        %v983 = vmul.f32 %v944, 0.088388346
        %v984 = vmul.f32 %v946, 0.088388346
        %v985 = vmul.f32 %v949, 0.088388346
        %v986 = vmul.f32 %v951, 0.088388346
        %v987 = vmul.f32 %v954, 0.088388346
        %v988 = vmul.f32 %v956, 0.088388346
        %v989 = vmul.f32 %v959, 0.088388346
        %v990 = vmul.f32 %v961, 0.088388346
        %v991 = vmul.f32 %v964, 0.088388346
        %v992 = vmul.f32 %v966, 0.088388346
        %v993 = vmul.f32 %v969, 0.088388346
        %v994 = vmul.f32 %v971, 0.088388346
        %v995 = vmul.f32 %v974, 0.088388346
        %v996 = vmul.f32 %v976, 0.088388346
        %v997 = vmul.f32 %v979, 0.088388346
        %v998 = vmul.f32 %v981, 0.088388346
        %v999 = vpack.c.bf16 %v983, %v983
        %v1000 = vpack.c.bf16 %v984, %v984
        %v1001 = vpack.c.bf16 %v985, %v985
        %v1002 = vpack.c.bf16 %v986, %v986
        %v1003 = vpack.c.bf16 %v987, %v987
        %v1004 = vpack.c.bf16 %v988, %v988
        %v1005 = vpack.c.bf16 %v989, %v989
        %v1006 = vpack.c.bf16 %v990, %v990
        %v1007 = vpack.c.bf16 %v991, %v991
        %v1008 = vpack.c.bf16 %v992, %v992
        %v1009 = vpack.c.bf16 %v993, %v993
        %v1010 = vpack.c.bf16 %v994, %v994
        %v1011 = vpack.c.bf16 %v995, %v995
        %v1012 = vpack.c.bf16 %v996, %v996
        %v1013 = vpack.c.bf16 %v997, %v997
        %v1014 = vpack.c.bf16 %v998, %v998
        %1015 = vst [vmem:[%s329] sm:$0xf] %v999
        %1016 = vst [vmem:[%s329 + $0x4] sm:$0xf] %v1000
        %1017 = vst [vmem:[%s329 + $0x8] sm:$0xf] %v1001
        %1018 = vst [vmem:[%s329 + $0xc] sm:$0xf] %v1002
        %1019 = vst [vmem:[%s329 + $0x10] sm:$0xf] %v1003
        %1020 = vst [vmem:[%s329 + $0x14] sm:$0xf] %v1004
        %1021 = vst [vmem:[%s329 + $0x18] sm:$0xf] %v1005
        %1022 = vst [vmem:[%s329 + $0x1c] sm:$0xf] %v1006
        %1023 = vst [vmem:[%s329 + $0x20] sm:$0xf] %v1007
        %1024 = vst [vmem:[%s329 + $0x24] sm:$0xf] %v1008
        %1025 = vst [vmem:[%s329 + $0x28] sm:$0xf] %v1009
        %1026 = vst [vmem:[%s329 + $0x2c] sm:$0xf] %v1010
        %1027 = vst [vmem:[%s329 + $0x30] sm:$0xf] %v1011
        %1028 = vst [vmem:[%s329 + $0x34] sm:$0xf] %v1012
        %1029 = vst [vmem:[%s329 + $0x38] sm:$0xf] %v1013
        %1030 = vst [vmem:[%s329 + $0x3c] sm:$0xf] %v1014
        %v1031 = vld [vmem:[%s2] sm:$0xff]
        %v1032 = vld [vmem:[%s2 + $0x8] sm:$0xff]
        %v1033 = vld [vmem:[%s2 + $0x10] sm:$0xff]
        %v1034 = vld [vmem:[%s2 + $0x18] sm:$0xff]
        %v1035 = vld [vmem:[%s2 + $0x20] sm:$0xff]
        %v1036 = vld [vmem:[%s2 + $0x28] sm:$0xff]
        %v1037 = vld [vmem:[%s2 + $0x30] sm:$0xff]
        %v1038 = vld [vmem:[%s2 + $0x38] sm:$0xff]
        %v1039 = vld [vmem:[%s2 + $0x40] sm:$0xff]
        %v1040 = vld [vmem:[%s2 + $0x48] sm:$0xff]
        %v1041 = vld [vmem:[%s2 + $0x50] sm:$0xff]
        %v1042 = vld [vmem:[%s2 + $0x58] sm:$0xff]
        %v1043 = vld [vmem:[%s2 + $0x60] sm:$0xff]
        %v1044 = vld [vmem:[%s2 + $0x68] sm:$0xff]
        %v1045 = vld [vmem:[%s2 + $0x70] sm:$0xff]
        %v1046 = vld [vmem:[%s2 + $0x78] sm:$0xff]
        %1048 = vset.pattern.permute.xlu0 0
        %1049 = vperm.xlu0 %1048, %v1031
        %v1050 = vpop.permute.xlu0 %1049
        %1053 = vset.pattern.permute.xlu0 0
        %1054 = vperm.xlu0 %1053, %v1032
        %v1055 = vpop.permute.xlu0 %1054
        %1058 = vset.pattern.permute.xlu0 0
        %1059 = vperm.xlu0 %1058, %v1033
        %v1060 = vpop.permute.xlu0 %1059
        %1063 = vset.pattern.permute.xlu0 0
        %1064 = vperm.xlu0 %1063, %v1034
        %v1065 = vpop.permute.xlu0 %1064
        %1068 = vset.pattern.permute.xlu0 0
        %1069 = vperm.xlu0 %1068, %v1035
        %v1070 = vpop.permute.xlu0 %1069
        %1073 = vset.pattern.permute.xlu0 0
        %1074 = vperm.xlu0 %1073, %v1036
        %v1075 = vpop.permute.xlu0 %1074
        %1078 = vset.pattern.permute.xlu0 0
        %1079 = vperm.xlu0 %1078, %v1037
        %v1080 = vpop.permute.xlu0 %1079
        %1083 = vset.pattern.permute.xlu0 0
        %1084 = vperm.xlu0 %1083, %v1038
        %v1085 = vpop.permute.xlu0 %1084
        %1088 = vset.pattern.permute.xlu0 0
        %1089 = vperm.xlu0 %1088, %v1039
        %v1090 = vpop.permute.xlu0 %1089
        %1093 = vset.pattern.permute.xlu0 0
        %1094 = vperm.xlu0 %1093, %v1040
        %v1095 = vpop.permute.xlu0 %1094
        %1098 = vset.pattern.permute.xlu0 0
        %1099 = vperm.xlu0 %1098, %v1041
        %v1100 = vpop.permute.xlu0 %1099
        %1103 = vset.pattern.permute.xlu0 0
        %1104 = vperm.xlu0 %1103, %v1042
        %v1105 = vpop.permute.xlu0 %1104
        %1108 = vset.pattern.permute.xlu0 0
        %1109 = vperm.xlu0 %1108, %v1043
        %v1110 = vpop.permute.xlu0 %1109
        %1113 = vset.pattern.permute.xlu0 0
        %1114 = vperm.xlu0 %1113, %v1044
        %v1115 = vpop.permute.xlu0 %1114
        %1118 = vset.pattern.permute.xlu0 0
        %1119 = vperm.xlu0 %1118, %v1045
        %v1120 = vpop.permute.xlu0 %1119
        %1123 = vset.pattern.permute.xlu0 0
        %1124 = vperm.xlu0 %1123, %v1046
        %v1125 = vpop.permute.xlu0 %1124
        %v1127 = vmul.f32 %v1050, %v582
        %v1128 = vmul.f32 %v1055, %v584
        %v1129 = vmul.f32 %v1060, %v587
        %v1130 = vmul.f32 %v1065, %v589
        %v1131 = vmul.f32 %v1070, %v592
        %v1132 = vmul.f32 %v1075, %v594
        %v1133 = vmul.f32 %v1080, %v597
        %v1134 = vmul.f32 %v1085, %v599
        %v1135 = vmul.f32 %v1090, %v602
        %v1136 = vmul.f32 %v1095, %v604
        %v1137 = vmul.f32 %v1100, %v607
        %v1138 = vmul.f32 %v1105, %v609
        %v1139 = vmul.f32 %v1110, %v612
        %v1140 = vmul.f32 %v1115, %v614
        %v1141 = vmul.f32 %v1120, %v617
        %v1142 = vmul.f32 %v1125, %v619
        %v1143 = vadd.f32 %v1127, %v1128
        %v1144 = vadd.f32 %v1143, %v1129
        %v1145 = vadd.f32 %v1144, %v1130
        %v1146 = vadd.f32 %v1145, %v1131
        %v1147 = vadd.f32 %v1146, %v1132
        %v1148 = vadd.f32 %v1147, %v1133
        %v1149 = vadd.f32 %v1148, %v1134
        %v1150 = vadd.f32 %v1149, %v1135
        %v1151 = vadd.f32 %v1150, %v1136
        %v1152 = vadd.f32 %v1151, %v1137
        %v1153 = vadd.f32 %v1152, %v1138
        %v1154 = vadd.f32 %v1153, %v1139
        %v1155 = vadd.f32 %v1154, %v1140
        %v1156 = vadd.f32 %v1155, %v1141
        %v1157 = vadd.f32 %v1156, %v1142
        %v1158 = vrot.slane %v1157, 4
        %v1159 = vadd.f32 %v1157, %v1158
        %v1160 = vrot.slane %v1159, 2
        %v1161 = vadd.f32 %v1159, %v1160
        %v1162 = vrot.slane %v1161, 1
        %v1163 = vadd.f32 %v1161, %v1162
        %v1164 = vmul.f32 %v1163, 0.088388346
        %1165 = vst [vmem:[%s342] sm:$0x1] %v1164
        %s1166 = sand.u32 %s187, 1
        %s1167 = scalar_lea.sflag [#allocation3], %s1166
        %s1168 = sand.u32 %s187, 1
        %s1169 = smul.addr %s1168, 64
        %s1170 = scalar_lea.vmem [#allocation2], %s1169
        %s1171 = sand.u32 %s27, 1
        %s1172 = scalar_lea.sflag [#allocation5], %s1171
        %s1173 = sand.u32 %s213, 1
        %s1174 = smul.addr %s1173, 64
        %s1175 = scalar_lea.vmem [#allocation4], %s1174
        %s1176 = sand.u32 %s27, 1
        %s1177 = scalar_lea.sflag [#allocation5], %s1176
        %s1178 = sand.u32 %s239, 1
        %s1179 = scalar_lea.vmem [#allocation6], %s1178
        // Predicated region
        $region49: #{tpu_custom_call.1} parent=47 // pred_check
          %p1180 = pneg %p197
        $region50: #{tpu_custom_call.1} parent=47 // pred_check_branch
          %1182 = sbr.rel (%p1180) target = $region52
        $region51: #{tpu_custom_call.1} parent=47 // pred_region
          %1184 = vsyncadd %s1167, 0
          %s1185 = smul.addr %s27, 16
          %s1186 = smul.addr %s1185, 4
          %s1187 = scalar_lea.hbm %s7, %s1186
          %s1188 = sshll.u32 %s1170, 4
          %s1189 = int_to_ptr.vmem [resolvable:$true] %s1188
          %s1190 = sshll.u32 %s1187, 4
          %s1191 = int_to_ptr.hbm [resolvable:$true] %s1190
          %1196 = dma.vmem_to_hbm [thread:$0]  %s1189, 1024, %s1191, %s1167, 64, 64, 4
        $region52: #{tpu_custom_call.1} parent=47 // pred_fallthru
          _
        // Predicated region
        $region53: #{tpu_custom_call.1} parent=47 // pred_check
          %p1197 = pneg %p223
        $region54: #{tpu_custom_call.1} parent=47 // pred_check_branch
          %1199 = sbr.rel (%p1197) target = $region56
        $region55: #{tpu_custom_call.1} parent=47 // pred_region
          %1201 = vsyncadd %s1172, 0
          %s1202 = smul.addr %s27, 16
          %s1203 = smul.addr %s1202, 4
          %s1204 = scalar_lea.hbm %s8, %s1203
          %s1205 = sshll.u32 %s1175, 4
          %s1206 = int_to_ptr.vmem [resolvable:$true] %s1205
          %s1207 = sshll.u32 %s1204, 4
          %s1208 = int_to_ptr.hbm [resolvable:$true] %s1207
          %1213 = dma.vmem_to_hbm [thread:$0]  %s1206, 1024, %s1208, %s1172, 64, 64, 4
        $region56: #{tpu_custom_call.1} parent=47 // pred_fallthru
          _
        // Predicated region
        $region57: #{tpu_custom_call.1} parent=47 // pred_check
          %p1214 = pneg %p249
        $region58: #{tpu_custom_call.1} parent=47 // pred_check_branch
          %1216 = sbr.rel (%p1214) target = $region60
        $region59: #{tpu_custom_call.1} parent=47 // pred_region
          %1218 = vsyncadd %s1177, 0
          %s1219 = scalar_lea.hbm %s9, %s27
          %s1221 = sshll.u32 %s1179, 4
          %s1222 = int_to_ptr.vmem [resolvable:$true] %s1221
          %s1223 = sshll.u32 %s1219, 4
          %s1224 = int_to_ptr.hbm [resolvable:$true] %s1223
          %1226 = dma.vmem_to_hbm [thread:$0]  %s1222, 16, %s1224, %s1177
        $region60: #{tpu_custom_call.1} parent=47 // pred_fallthru
          _
      $region48: #{tpu_custom_call.1} parent=5 // pred_fallthru
        _
      %p1227 = scmp.le.s32.totalorder 2, %s22
      // Predicated region
      $region61: #{tpu_custom_call.1} parent=5 // pred_check
        %p1228 = pneg %p1227
      $region62: #{tpu_custom_call.1} parent=5 // pred_check_branch
        %1230 = sbr.rel (%p1228) target = $region64
      $region63: #{tpu_custom_call.1} parent=5 // pred_region
        %s1231 = ssub.s32 %s22, 2
        // Predicated region
        $region65: #{tpu_custom_call.1} parent=63 // pred_check
          %p1232 = pneg %p203
        $region66: #{tpu_custom_call.1} parent=63 // pred_check_branch
          %1234 = sbr.rel (%p1232) target = $region68
        $region67: #{tpu_custom_call.1} parent=63 // pred_region
          %s1235 = sand.u32 %s188, 1
          %s1236 = scalar_lea.sflag [#allocation3], %s1235
          %s1237 = sand.u32 %s188, 1
          %s1238 = smul.addr %s1237, 64
          %s1239 = scalar_lea.vmem [#allocation2], %s1238
          %1241 = dma.done %s1236, 1024
        $region68: #{tpu_custom_call.1} parent=63 // pred_fallthru
          _
        // Predicated region
        $region69: #{tpu_custom_call.1} parent=63 // pred_check
          %p1242 = pneg %p229
        $region70: #{tpu_custom_call.1} parent=63 // pred_check_branch
          %1244 = sbr.rel (%p1242) target = $region72
        $region71: #{tpu_custom_call.1} parent=63 // pred_region
          %s1245 = sand.u32 %s28, 1
          %s1246 = scalar_lea.sflag [#allocation5], %s1245
          %s1247 = sand.u32 %s214, 1
          %s1248 = smul.addr %s1247, 64
          %s1249 = scalar_lea.vmem [#allocation4], %s1248
          %1251 = dma.done %s1246, 1024
        $region72: #{tpu_custom_call.1} parent=63 // pred_fallthru
          _
        // Predicated region
        $region73: #{tpu_custom_call.1} parent=63 // pred_check
          %p1252 = pneg %p255
        $region74: #{tpu_custom_call.1} parent=63 // pred_check_branch
          %1254 = sbr.rel (%p1252) target = $region76
        $region75: #{tpu_custom_call.1} parent=63 // pred_region
          %s1255 = sand.u32 %s28, 1
          %s1256 = scalar_lea.sflag [#allocation5], %s1255
          %s1257 = sand.u32 %s240, 1
          %s1258 = scalar_lea.vmem [#allocation6], %s1257
          %1260 = dma.done %s1256, 16
        $region76: #{tpu_custom_call.1} parent=63 // pred_fallthru
          _
      $region64: #{tpu_custom_call.1} parent=5 // pred_fallthru
        _
    $region6: #{tpu_custom_call.1} parent=1 // loop_footer
      %s26 = sadd.s32 1, %s22
    $region7: #{tpu_custom_call.1} parent=1 // loop_footer_branch
      %21 = sbr.rel target = $region3
    $region8: #{tpu_custom_call.1} parent=1 // loop_exit
      _
    %1261 = vsyncpa [#allocation3], 1
    %s1262 = scalar_lea.sflag [#allocation3], 1
    %1263 = vsyncpa %s1262, 1
    %1264 = vsyncpa [#allocation5], 1
    %s1265 = scalar_lea.sflag [#allocation5], 1
    %1266 = vsyncpa %s1265, 1

</llo_original>
